<compile_context>
chip_gen: v5e
topology: v5e:2x2
jax: 0.10.0
libtpu: 0.0.40
codegen_flags: <defaults>
</compile_context>

<pallas_src>
import functools

import jax
import jax.numpy as jnp
from jax import lax
from jax.experimental import pallas as pl
from jax.experimental.pallas import tpu as pltpu


def _kld_tile_kernel(logit_ref, target_ref, out_ref, *, hw, tile_hw, has_tail, log_target):
    # Blocks are (1, C, tile_hw); drop the leading batch dim and upcast to f32
    # (mandatory on v5e which has no bf16 VPU/EUP; good for softmax stability everywhere).
    x = logit_ref[0].astype(jnp.float32)   # (C, tile_hw)
    t = target_ref[0].astype(jnp.float32)  # (C, tile_hw)

    if has_tail:
        # Last spatial tile reads past the array bounds; zero out the padded lanes so they
        # contribute exactly nothing (and garbage x can't poison max/exp).
        start = pl.program_id(1) * tile_hw
        lane = lax.broadcasted_iota(jnp.int32, (1, tile_hw), 1)
        valid = (start + lane) < hw                      # (1, tile_hw), broadcasts over C
        x = jnp.where(valid, x, 0.0)
        # For log_target, a large negative value makes exp(t) underflow to exactly 0.
        t = jnp.where(valid, t, -1e30 if log_target else 0.0)

    # Numerically stable log-sum-exp over the class (sublane) axis.
    m = jnp.max(x, axis=0, keepdims=True)                              # (1, tile_hw)
    lse = jnp.log(jnp.sum(jnp.exp(x - m), axis=0, keepdims=True)) + m  # (1, tile_hw)

    # sum_tile t*(log t - (x - lse)) = sum xlogy(t,t) - sum t*x + sum_lanes(lse * sum_c t)
    if log_target:
        # target holds log-probabilities lt; pointwise kl = exp(lt) * (lt - log_softmax(x)).
        p = jnp.exp(t)
        ent = jnp.sum(p * t)
        cross = jnp.sum(p * x)
        psum = jnp.sum(p, axis=0, keepdims=True)                       # (1, tile_hw)
    else:
        # PyTorch kl_div pointwise: t * (log t - input), with xlogy(0, 0) := 0.
        ent = jnp.sum(jnp.where(t > 0, t * jnp.log(jnp.where(t > 0, t, 1.0)), 0.0))
        cross = jnp.sum(t * x)
        psum = jnp.sum(t, axis=0, keepdims=True)                       # (1, tile_hw)

    partial = ent - cross + jnp.sum(lse * psum)
    out_ref[...] = partial.reshape(1, 1, 1, 1)


def _round_up(x, m):
    return ((x + m - 1) // m) * m


def _pick_tile_hw(hw, c, itemsize, vmem_budget_bytes):
    """Lane-tile size (multiple of 128) from an explicit per-step VMEM budget.

    Budget model: 2 inputs x 2 pipeline buffers of the input-dtype tile
                  + ~4 tile-sized f32 temporaries from the elementwise chain.
    """
    bytes_per_lane = c * (4 * itemsize + 4 * 4)
    budget_lanes = max(1, vmem_budget_bytes // bytes_per_lane)
    tile_hw = max(512, (budget_lanes // 128) * 128)      # >=512 lanes -> >=2 KiB f32 DMA rows
    tile_hw = min(tile_hw, _round_up(hw, 128))           # never bigger than the padded axis
    return tile_hw


def kl_div_loss(model_output, target, *, log_target=False,
                vmem_budget_bytes=40 * 1024 * 1024):
    """Equivalent of KLDivLoss().forward(model_output, target) for NCHW inputs.

    nn.KLDivLoss() default reduction='mean' == sum over all elements / numel.
    (For 'batchmean' semantics divide by N instead.)
    """
    N, C, H, W = model_output.shape
    HW = H * W
    numel = N * C * HW

    # Free reshapes (contiguous NCHW): softmax axis C stays second, spatial goes to lanes.
    x3 = model_output.reshape(N, C, HW)
    t3 = target.reshape(N, C, HW)

    itemsize = jnp.dtype(model_output.dtype).itemsize
    tile_hw = _pick_tile_hw(HW, C, itemsize, vmem_budget_bytes)
    num_tiles = pl.cdiv(HW, tile_hw)
    has_tail = (HW % tile_hw) != 0

    kernel = functools.partial(
        _kld_tile_kernel, hw=HW, tile_hw=tile_hw, has_tail=has_tail, log_target=log_target)

    cost = pl.CostEstimate(
        flops=10 * numel,
        transcendentals=2 * numel,
        bytes_accessed=2 * numel * itemsize + N * num_tiles * 4,
    )

    partials = pl.pallas_call(
        kernel,
        out_shape=jax.ShapeDtypeStruct((N, num_tiles, 1, 1), jnp.float32),
        grid_spec=pltpu.PrefetchScalarGridSpec(
            num_scalar_prefetch=0,
            grid=(N, num_tiles),
            in_specs=[
                pl.BlockSpec((1, C, tile_hw), lambda n, s: (n, 0, s)),
                pl.BlockSpec((1, C, tile_hw), lambda n, s: (n, 0, s)),
            ],
            out_specs=pl.BlockSpec((1, 1, 1, 1), lambda n, s: (n, s, 0, 0)),
        ),
        compiler_params=pltpu.CompilerParams(
            # Independent per-tile partial sums -> both axes parallel (v7x runs both TCs).
            dimension_semantics=("parallel", "parallel"),
            # <=48 MiB keeps the bigger tiles safe on v7x (64 MiB/TC) and v5e/v6e (128 MiB).
            vmem_limit_bytes=48 * 1024 * 1024,
        ),
        cost_estimate=cost,
    )(x3, t3)

    # Tiny per-tile partials tree-summed in f32 by XLA; keep the reduced loss in f32.
    return jnp.sum(partials) / numel


def _reference(model_output, target):
    log_sm = jax.nn.log_softmax(model_output.astype(jnp.float32), axis=1)
    t = target.astype(jnp.float32)
    t_safe = jnp.where(t > 0, t, 1.0)
    kl = jnp.where(t > 0, t * (jnp.log(t_safe) - log_sm), 0.0)
    return jnp.mean(kl)


if __name__ == "__main__":
    key = jax.random.PRNGKey(0)
    k1, k2, k3, k4 = jax.random.split(key, 4)

    # Main check: evenly tiled spatial axis.
    N, C, H, W = 2, 4, 16, 16
    model_output = jax.random.normal(k1, (N, C, H, W), dtype=jnp.float32)
    target = jax.nn.softmax(jax.random.normal(k2, (N, C, H, W), dtype=jnp.float32), axis=1)

    loss = kl_div_loss(model_output, target)
    jax.block_until_ready(loss)
    ref = _reference(model_output, target)
    assert jnp.allclose(loss, ref, atol=1e-5, rtol=1e-5), (loss, ref)

    # Second check exercises the masked-tail path (HW = 81, tile_hw = 128).
    N2, C2, H2, W2 = 2, 4, 9, 9
    mo2 = jax.random.normal(k3, (N2, C2, H2, W2), dtype=jnp.float32)
    tg2 = jax.nn.softmax(jax.random.normal(k4, (N2, C2, H2, W2), dtype=jnp.float32), axis=1)

    loss2 = kl_div_loss(mo2, tg2)
    jax.block_until_ready(loss2)
    ref2 = _reference(mo2, tg2)
    assert jnp.allclose(loss2, ref2, atol=1e-5, rtol=1e-5), (loss2, ref2)

    print("KERNEL_OK")
</pallas_src>

<mosaic_0001>
module attributes {stable_mosaic.version = 11 : i64} {
  func.func @_kld_tile_kernel(%arg0: i32, %arg1: i32, %arg2: memref<1x4x256xf32, #tpu.memory_space<vmem>>, %arg3: memref<1x4x256xf32, #tpu.memory_space<vmem>>, %arg4: memref<1x1x1x1xf32, #tpu.memory_space<vmem>>) attributes {dimension_semantics = [#tpu.dimension_semantics<parallel>, #tpu.dimension_semantics<parallel>], iteration_bounds = array<i64: 2, 1>, scalar_prefetch = 0 : i64, scratch_operands = 0 : i64, tpu.core_type = #tpu.core_type<tc>, window_params = [{transform_indices = @transform_0, window_bounds = array<i64: 1, 4, 256>}, {transform_indices = @transform_1, window_bounds = array<i64: 1, 4, 256>}, {transform_indices = @transform_2, window_bounds = array<i64: 1, 1, 1, 1>}]} {
    %c0 = arith.constant 0 : index
    %c0_0 = arith.constant 0 : index
    %c0_1 = arith.constant 0 : index
    %0 = vector.load %arg2[%c0, %c0_0, %c0_1] : memref<1x4x256xf32, #tpu.memory_space<vmem>>, vector<1x4x256xf32>
    %1 = vector.shape_cast %0 : vector<1x4x256xf32> to vector<4x256xf32>
    %c0_2 = arith.constant 0 : index
    %c0_3 = arith.constant 0 : index
    %c0_4 = arith.constant 0 : index
    %2 = vector.load %arg3[%c0_2, %c0_3, %c0_4] : memref<1x4x256xf32, #tpu.memory_space<vmem>>, vector<1x4x256xf32>
    %3 = vector.shape_cast %2 : vector<1x4x256xf32> to vector<4x256xf32>
    %cst = arith.constant dense<0xFF800000> : vector<256xf32>
    %4 = vector.multi_reduction <maximumf>, %1, %cst [0] : vector<4x256xf32> to vector<256xf32>
    %5 = vector.shape_cast %4 : vector<256xf32> to vector<1x256xf32>
    %6 = vector.broadcast %5 : vector<1x256xf32> to vector<4x256xf32>
    %7 = arith.subf %1, %6 : vector<4x256xf32>
    %8 = math.exp %7 : vector<4x256xf32>
    %cst_5 = arith.constant dense<0.000000e+00> : vector<256xf32>
    %9 = vector.multi_reduction <add>, %8, %cst_5 [0] : vector<4x256xf32> to vector<256xf32>
    %10 = vector.shape_cast %9 : vector<256xf32> to vector<1x256xf32>
    %11 = math.log %10 : vector<1x256xf32>
    %12 = arith.addf %11, %5 : vector<1x256xf32>
    %cst_6 = arith.constant 0.000000e+00 : f32
    %13 = vector.broadcast %cst_6 : f32 to vector<4x256xf32>
    %14 = arith.cmpf ogt, %3, %13 : vector<4x256xf32>
    %cst_7 = arith.constant 0.000000e+00 : f32
    %15 = vector.broadcast %cst_7 : f32 to vector<4x256xf32>
    %16 = arith.cmpf ogt, %3, %15 : vector<4x256xf32>
    %cst_8 = arith.constant 1.000000e+00 : f32
    %17 = vector.broadcast %cst_8 : f32 to vector<4x256xf32>
    %18 = arith.select %16, %3, %17 : vector<4x256xi1>, vector<4x256xf32>
    %19 = math.log %18 : vector<4x256xf32>
    %20 = arith.mulf %3, %19 : vector<4x256xf32>
    %cst_9 = arith.constant 0.000000e+00 : f32
    %21 = vector.broadcast %cst_9 : f32 to vector<4x256xf32>
    %22 = arith.select %14, %20, %21 : vector<4x256xi1>, vector<4x256xf32>
    %23 = vector.shape_cast %22 : vector<4x256xf32> to vector<1x4x256xf32>
    %cst_10 = arith.constant dense<0.000000e+00> : vector<1xf32>
    %24 = vector.multi_reduction <add>, %23, %cst_10 [1, 2] : vector<1x4x256xf32> to vector<1xf32>
    %25 = vector.shape_cast %24 : vector<1xf32> to vector<1x1x1xf32>
    %26 = vector.extract %25[0, 0, 0] : f32 from vector<1x1x1xf32>
    %27 = arith.mulf %3, %1 : vector<4x256xf32>
    %28 = vector.shape_cast %27 : vector<4x256xf32> to vector<1x4x256xf32>
    %cst_11 = arith.constant dense<0.000000e+00> : vector<1xf32>
    %29 = vector.multi_reduction <add>, %28, %cst_11 [1, 2] : vector<1x4x256xf32> to vector<1xf32>
    %30 = vector.shape_cast %29 : vector<1xf32> to vector<1x1x1xf32>
    %31 = vector.extract %30[0, 0, 0] : f32 from vector<1x1x1xf32>
    %cst_12 = arith.constant dense<0.000000e+00> : vector<256xf32>
    %32 = vector.multi_reduction <add>, %3, %cst_12 [0] : vector<4x256xf32> to vector<256xf32>
    %33 = vector.shape_cast %32 : vector<256xf32> to vector<1x256xf32>
    %34 = arith.subf %26, %31 : f32
    %35 = arith.mulf %12, %33 : vector<1x256xf32>
    %36 = vector.shape_cast %35 : vector<1x256xf32> to vector<1x1x256xf32>
    %cst_13 = arith.constant dense<0.000000e+00> : vector<1xf32>
    %37 = vector.multi_reduction <add>, %36, %cst_13 [1, 2] : vector<1x1x256xf32> to vector<1xf32>
    %38 = vector.shape_cast %37 : vector<1xf32> to vector<1x1x1xf32>
    %39 = vector.extract %38[0, 0, 0] : f32 from vector<1x1x1xf32>
    %40 = arith.addf %34, %39 : f32
    %41 = vector.broadcast %40 : f32 to vector<1x1x1x1xf32>
    %c0_14 = arith.constant 0 : index
    %c0_15 = arith.constant 0 : index
    %c0_16 = arith.constant 0 : index
    %c0_17 = arith.constant 0 : index
    %42 = vector.load %arg4[%c0_14, %c0_15, %c0_16, %c0_17] : memref<1x1x1x1xf32, #tpu.memory_space<vmem>>, vector<1x1x1x1xf32>
    tpu.vector_store %arg4[%c0_14, %c0_15, %c0_16, %c0_17], %41 {strides = array<i32>} : memref<1x1x1x1xf32, #tpu.memory_space<vmem>>, vector<1x1x1x1xf32>,
    return
  }
  func.func @transform_0(%arg0: i32, %arg1: i32) -> (i32, i32, i32) {
    %c0_i32 = arith.constant 0 : i32
    %c0_i32_0 = arith.constant 0 : i32
    return %arg0, %c0_i32, %arg1 : i32, i32, i32
  }
  func.func @transform_1(%arg0: i32, %arg1: i32) -> (i32, i32, i32) {
    %c0_i32 = arith.constant 0 : i32
    %c0_i32_0 = arith.constant 0 : i32
    return %arg0, %c0_i32, %arg1 : i32, i32, i32
  }
  func.func @transform_2(%arg0: i32, %arg1: i32) -> (i32, i32, i32, i32) {
    %c0_i32 = arith.constant 0 : i32
    %c0_i32_0 = arith.constant 0 : i32
    %c0_i32_1 = arith.constant 0 : i32
    return %arg0, %arg1, %c0_i32, %c0_i32_0 : i32, i32, i32, i32
  }
}

</mosaic_0001>

<llo_original>
// kernel: tpu_custom_call.1
$region0: #{tpu_custom_call.1}
  #allocation0 [shape = 'u32[]', space=smem, size = 0x4, offset = 0x4, fixed_abs, tag = 'smem constant byte address 0x4 - core index']
  #allocation1 [shape = 'u32[72,128]{1,0:T(1,128)}', space=vmem, size = 0x9000, scoped, tag = 'internal scratch']
  %s0 = inlined_call_operand.hbm [shape: f32[2,4,256], index: 0, kind: input, shape index: {}]
  %s1 = inlined_call_operand.hbm [shape: f32[2,4,256], index: 1, kind: input, shape index: {}]
  %s2 = inlined_call_operand.vmem [shape: f32[2,1,1,1], index: 2, kind: output, shape index: {}]
  %s3 = sld [smem:[#allocation0]]
  $region49: #{tpu_custom_call.1} parent=0
    _
  %s5 = ssub.s32 1, %s3
  %s6 = scalar_select 0, %s5, %s3
  $region1: #{tpu_custom_call.1} parent=0
    #allocation2 [shape = 'u8[8192]{0}', space=vmem, size = 0x2000, scoped, tag = 'input window, operand 0']
    #allocation3 [shape = 's32[2]{0}', space=sflag, size = 0x8, scoped, tag = 'scoped memory for tpu_custom_call.1']
    #allocation4 [shape = 'u8[8192]{0}', space=vmem, size = 0x2000, scoped, tag = 'input window, operand 1']
    #allocation5 [shape = 's32[2]{0}', space=sflag, size = 0x8, scoped, tag = 'scoped memory for tpu_custom_call.1']
    %7 = vsyncpa [#allocation3], 0
    %s8 = scalar_lea.sflag [#allocation3], 1
    %9 = vsyncpa %s8, 0
    %10 = vsyncpa [#allocation5], 0
    %s11 = scalar_lea.sflag [#allocation5], 1
    %12 = vsyncpa %s11, 0
    loop: start=0, step=1, limit=4
    $region2: #{tpu_custom_call.1} parent=1 // loop_pre_header
      _
    $region3: #{tpu_custom_call.1} parent=1 // loop_header
      %s14 = sphi 0, %s18
      %p15 = scmp.ge.s32.totalorder %s14, 4
      %s21 = sphi 0, %s33
      %s22 = sphi 0, %s29
      %s23 = sphi 0, %s21
      %s24 = sphi 0, %s22
      %s25 = sphi 0, %s23
      %s26 = sphi 0, %s24
      %s38 = sphi 0, %s40
      %s41 = sphi 0, %s38
      %s42 = sphi 0, %s41
      %s58 = sphi 0, %s42
      %s66 = sphi 0, %s68
      %s69 = sphi 0, %s66
      %s70 = sphi 0, %s69
      %s86 = sphi 0, %s70
      %s94 = sphi 0, %s96
      %s97 = sphi 0, %s94
      %s98 = sphi 0, %s97
      %s114 = sphi 0, %s98
    $region4: #{tpu_custom_call.1} parent=1 // loop_header_branch
      %17 = sbr.rel (%p15) target = $region8
    $region5: #{tpu_custom_call.1} parent=1 // loop_body
      %s19 = ssub.s32 %s14, 1
      %s20 = ssub.s32 %s14, 2
      %s27 = sadd.s32 1, %s22
      %p28 = scmp.ge.s32.totalorder %s27, 1
      %s29 = scalar_select %p28, 0, %s27
      %s30 = sadd.s32 1, %s21
      %s31 = scalar_select %p28, %s30, %s21
      %p32 = scmp.ge.s32.totalorder %s31, 2
      %s33 = scalar_select %p32, 0, %s31
      %s34 = ssub.s32 %s21, %s33
      %s35 = ssub.s32 %s22, %s29
      %s36 = sor.u32 %s34, %s35
      %p37 = scmp.eq.s32.totalorder %s36, 0
      %s39 = sadd.s32 %s38, 1
      %s40 = scalar_select %p37, %s38, %s39
      %p43 = pneg %p37
      %p44 = scmp.eq.s32.totalorder %s14, 1
      %p45 = por %p43, %p44
      %p46 = scmp.ne.s32.totalorder %s38, %s41
      %p47 = scmp.eq.s32.totalorder %s14, 0
      %p48 = por %p46, %p47
      %p49 = scmp.ne.s32.totalorder %s38, %s41
      %p50 = scmp.eq.s32.totalorder %s19, 1
      %p51 = por %p49, %p50
      %p52 = scmp.ne.s32.totalorder %s41, %s42
      %p53 = scmp.eq.s32.totalorder %s19, 0
      %p54 = por %p52, %p53
      %p55 = scmp.ne.s32.totalorder %s41, %s42
      %p56 = scmp.eq.s32.totalorder %s20, 1
      %p57 = por %p55, %p56
      %p59 = scmp.ne.s32.totalorder %s42, %s58
      %p60 = scmp.eq.s32.totalorder %s20, 0
      %p61 = por %p59, %p60
      %s62 = ssub.s32 %s21, %s33
      %s63 = ssub.s32 %s22, %s29
      %s64 = sor.u32 %s62, %s63
      %p65 = scmp.eq.s32.totalorder %s64, 0
      %s67 = sadd.s32 %s66, 1
      %s68 = scalar_select %p65, %s66, %s67
      %p71 = pneg %p65
      %p72 = scmp.eq.s32.totalorder %s14, 1
      %p73 = por %p71, %p72
      %p74 = scmp.ne.s32.totalorder %s66, %s69
      %p75 = scmp.eq.s32.totalorder %s14, 0
      %p76 = por %p74, %p75
      %p77 = scmp.ne.s32.totalorder %s66, %s69
      %p78 = scmp.eq.s32.totalorder %s19, 1
      %p79 = por %p77, %p78
      %p80 = scmp.ne.s32.totalorder %s69, %s70
      %p81 = scmp.eq.s32.totalorder %s19, 0
      %p82 = por %p80, %p81
      %p83 = scmp.ne.s32.totalorder %s69, %s70
      %p84 = scmp.eq.s32.totalorder %s20, 1
      %p85 = por %p83, %p84
      %p87 = scmp.ne.s32.totalorder %s70, %s86
      %p88 = scmp.eq.s32.totalorder %s20, 0
      %p89 = por %p87, %p88
      %s90 = ssub.s32 %s21, %s33
      %s91 = ssub.s32 %s22, %s29
      %s92 = sor.u32 %s90, %s91
      %p93 = scmp.eq.s32.totalorder %s92, 0
      %s95 = sadd.s32 %s94, 1
      %s96 = scalar_select %p93, %s94, %s95
      %p99 = pneg %p93
      %p100 = scmp.eq.s32.totalorder %s14, 1
      %p101 = por %p99, %p100
      %p102 = scmp.ne.s32.totalorder %s94, %s97
      %p103 = scmp.eq.s32.totalorder %s14, 0
      %p104 = por %p102, %p103
      %p105 = scmp.ne.s32.totalorder %s94, %s97
      %p106 = scmp.eq.s32.totalorder %s19, 1
      %p107 = por %p105, %p106
      %p108 = scmp.ne.s32.totalorder %s97, %s98
      %p109 = scmp.eq.s32.totalorder %s19, 0
      %p110 = por %p108, %p109
      %p111 = scmp.ne.s32.totalorder %s97, %s98
      %p112 = scmp.eq.s32.totalorder %s20, 1
      %p113 = por %p111, %p112
      %p115 = scmp.ne.s32.totalorder %s98, %s114
      %p116 = scmp.eq.s32.totalorder %s20, 0
      %p117 = por %p115, %p116
      %p118 = scmp.le.s32.totalorder 1, %s14
      %p119 = scmp.lt.s32.totalorder %s14, 3
      %p120 = pnand %p118, %p119
      %p121 = pneg %p120
      // Predicated region
      $region9: #{tpu_custom_call.1} parent=5 // pred_check
        _
      $region10: #{tpu_custom_call.1} parent=5 // pred_check_branch
        %123 = sbr.rel (%p120) target = $region12
      $region11: #{tpu_custom_call.1} parent=5 // pred_region
        %s124 = ssub.s32 %s14, 1
      $region12: #{tpu_custom_call.1} parent=5 // pred_fallthru
        _
      %p125 = scmp.lt.s32.totalorder %s14, 2
      // Predicated region
      $region13: #{tpu_custom_call.1} parent=5 // pred_check
        %p126 = pneg %p125
      $region14: #{tpu_custom_call.1} parent=5 // pred_check_branch
        %128 = sbr.rel (%p126) target = $region16
      $region15: #{tpu_custom_call.1} parent=5 // pred_region
        // Predicated region
        $region17: #{tpu_custom_call.1} parent=15 // pred_check
          %p129 = pneg %p48
        $region18: #{tpu_custom_call.1} parent=15 // pred_check_branch
          %131 = sbr.rel (%p129) target = $region20
        $region19: #{tpu_custom_call.1} parent=15 // pred_region
          %s132 = sand.u32 %s38, 1
          %s133 = scalar_lea.sflag [#allocation3], %s132
          %s134 = sand.u32 %s38, 1
          %s135 = smul.addr %s134, 8
          %s136 = scalar_lea.vmem [#allocation2], %s135
          %s137 = smul.u32 2, %s22
          %139 = vsyncadd %s133, 0
          %s140 = smul.addr %s21, 2
          %s141 = sadd.s32 %s137, %s140
          %s142 = smul.addr %s141, 4
          %s143 = scalar_lea.hbm %s0, %s142
          %s145 = sshll.u32 %s143, 4
          %s146 = int_to_ptr.hbm [resolvable:$true] %s145
          %s147 = sshll.u32 %s136, 4
          %s148 = int_to_ptr.vmem [resolvable:$true] %s147
          %150 = dma.hbm_to_vmem [thread:$0]  %s146, 128, %s148, %s133
        $region20: #{tpu_custom_call.1} parent=15 // pred_fallthru
          _
        // Predicated region
        $region21: #{tpu_custom_call.1} parent=15 // pred_check
          %p151 = pneg %p76
        $region22: #{tpu_custom_call.1} parent=15 // pred_check_branch
          %153 = sbr.rel (%p151) target = $region24
        $region23: #{tpu_custom_call.1} parent=15 // pred_region
          %s154 = sand.u32 %s66, 1
          %s155 = scalar_lea.sflag [#allocation5], %s154
          %s156 = sand.u32 %s66, 1
          %s157 = smul.addr %s156, 8
          %s158 = scalar_lea.vmem [#allocation4], %s157
          %s159 = smul.u32 2, %s22
          %161 = vsyncadd %s155, 0
          %s162 = smul.addr %s21, 2
          %s163 = sadd.s32 %s159, %s162
          %s164 = smul.addr %s163, 4
          %s165 = scalar_lea.hbm %s1, %s164
          %s167 = sshll.u32 %s165, 4
          %s168 = int_to_ptr.hbm [resolvable:$true] %s167
          %s169 = sshll.u32 %s158, 4
          %s170 = int_to_ptr.vmem [resolvable:$true] %s169
          %172 = dma.hbm_to_vmem [thread:$0]  %s168, 128, %s170, %s155
        $region24: #{tpu_custom_call.1} parent=15 // pred_fallthru
          _
      $region16: #{tpu_custom_call.1} parent=5 // pred_fallthru
        _
      %p173 = scmp.le.s32.totalorder 1, %s14
      %p174 = scmp.lt.s32.totalorder %s14, 3
      %p175 = pnand %p173, %p174
      %p176 = pneg %p175
      // Predicated region
      $region25: #{tpu_custom_call.1} parent=5 // pred_check
        _
      $region26: #{tpu_custom_call.1} parent=5 // pred_check_branch
        %178 = sbr.rel (%p175) target = $region28
      $region27: #{tpu_custom_call.1} parent=5 // pred_region
        %s179 = ssub.s32 %s14, 1
        %s180 = sand.u32 %s41, 1
        %s181 = scalar_lea.sflag [#allocation3], %s180
        %s182 = sand.u32 %s41, 1
        %s183 = smul.addr %s182, 8
        %s184 = scalar_lea.vmem [#allocation2], %s183
        // Predicated region
        $region29: #{tpu_custom_call.1} parent=27 // pred_check
          %p185 = pneg %p54
        $region30: #{tpu_custom_call.1} parent=27 // pred_check_branch
          %187 = sbr.rel (%p185) target = $region32
        $region31: #{tpu_custom_call.1} parent=27 // pred_region
          %189 = dma.done %s181, 128
        $region32: #{tpu_custom_call.1} parent=27 // pred_fallthru
          _
        %s190 = sand.u32 %s69, 1
        %s191 = scalar_lea.sflag [#allocation5], %s190
        %s192 = sand.u32 %s69, 1
        %s193 = smul.addr %s192, 8
        %s194 = scalar_lea.vmem [#allocation4], %s193
        // Predicated region
        $region33: #{tpu_custom_call.1} parent=27 // pred_check
          %p195 = pneg %p82
        $region34: #{tpu_custom_call.1} parent=27 // pred_check_branch
          %197 = sbr.rel (%p195) target = $region36
        $region35: #{tpu_custom_call.1} parent=27 // pred_region
          %199 = dma.done %s191, 128
        $region36: #{tpu_custom_call.1} parent=27 // pred_fallthru
          _
        %s200 = sand.u32 %s41, 1
        %s201 = scalar_lea.sflag [#allocation3], %s200
        %s202 = sand.u32 %s41, 1
        %s203 = smul.addr %s202, 8
        %s204 = scalar_lea.vmem [#allocation2], %s203
        %p205 = pneg %p54
        %p206 = pneg %p51
        %s207 = sand.u32 %s69, 1
        %s208 = scalar_lea.sflag [#allocation5], %s207
        %s209 = sand.u32 %s69, 1
        %s210 = smul.addr %s209, 8
        %s211 = scalar_lea.vmem [#allocation4], %s210
        %p212 = pneg %p82
        %p213 = pneg %p79
        %p214 = pneg %p110
        %p215 = pneg %p107
        %p216 = scmp.lt.s32.totalorder %s23, 1
        %s217 = scalar_select %p216, %s23, 1
        %p218 = scmp.lt.s32.totalorder %s24, 0
        %s219 = scalar_select %p218, %s24, 0
        %s220 = sadd.s32 %s219, %s217
        %s221 = scalar_lea.vmem %s2, %s220
        %s222 = smul.u32 2, %s24
        %s223 = smul.u32 2, %s24
        %p224 = scmp.lt.s32.totalorder %s23, 1
        %s225 = scalar_select %p224, %s23, 1
        %p226 = scmp.lt.s32.totalorder %s24, 0
        %s227 = scalar_select %p226, %s24, 0
        %s228 = sadd.s32 %s227, %s225
        %s229 = scalar_lea.vmem %s2, %s228
        %v230 = vld [vmem:[%s184] sm:$0xff]
        %v231 = vld [vmem:[%s194] sm:$0xff]
        %233 = vst [vmem:[#allocation1] ss:$2 sm:$0xff] %v230
        %v234 = vld.sshfl [vmem:[#allocation1] sm:$0xff pattern:$0x75316420]
        %v235 = vld.sshfl [vmem:[#allocation1 + $0x8] sm:$0xff pattern:$0x75316420]
        %vm238 = vcmask 1043456
        %v239 = vsel %vm238, %v234, -inf
        %v240 = vrot.slane %v239, 4
        %v241 = vmax.f32 %v239, %v240
        %v242 = vrot.slane %v241, 2
        %v243 = vmax.f32 %v241, %v242
        %v244 = vrot.slane %v243, 1
        %v245 = vmax.f32 %v243, %v244
        %v246 = vsel %vm238, %v235, -inf
        %v247 = vrot.slane %v246, 4
        %v248 = vmax.f32 %v246, %v247
        %v249 = vrot.slane %v248, 2
        %v250 = vmax.f32 %v248, %v249
        %v251 = vrot.slane %v250, 1
        %v252 = vmax.f32 %v250, %v251
        %v255 = vrot.slane %v252, 4
        %v256 = vsel %vm238, %v245, %v255
        %v258 = vsub.f32 %v230, %v256
        %v259 = vmul.f32 %v258, 1.442695
        %v260 = vpow.pop %v259
        %262 = vst [vmem:[#allocation1] ss:$2 sm:$0xff] %v260
        %v263 = vld.sshfl [vmem:[#allocation1] sm:$0xff pattern:$0x75316420]
        %v264 = vld.sshfl [vmem:[#allocation1 + $0x8] sm:$0xff pattern:$0x75316420]
        %v267 = vsel %vm238, %v263, 0.0
        %v268 = vrot.slane %v267, 4
        %v269 = vadd.f32 %v267, %v268
        %v270 = vrot.slane %v269, 2
        %v271 = vadd.f32 %v269, %v270
        %v272 = vrot.slane %v271, 1
        %v273 = vadd.f32 %v271, %v272
        %v274 = vsel %vm238, %v264, 0.0
        %v275 = vrot.slane %v274, 4
        %v276 = vadd.f32 %v274, %v275
        %v277 = vrot.slane %v276, 2
        %v278 = vadd.f32 %v276, %v277
        %v279 = vrot.slane %v278, 1
        %v280 = vadd.f32 %v278, %v279
        %v281 = vlog2.pop %v273
        %v282 = vmul.f32 %v281, 0.6931472
        %v283 = vlog2.pop %v280
        %v284 = vmul.f32 %v283, 0.6931472
        %v285 = vadd.f32 %v282, %v245
        %v286 = vadd.f32 %v284, %v252
        %vm287 = vcmp.gt.f32.partialorder %v231, 0.0
        %v288 = vsel %vm287, %v231, 1.0
        %v289 = vlog2.pop %v288
        %v290 = vmul.f32 %v289, 0.6931472
        %v291 = vmul.f32 %v231, %v290
        %v292 = vsel %vm287, %v291, 0.0
        %294 = vst [vmem:[#allocation1] ss:$2 sm:$0xff] %v292
        %v295 = vld.sshfl [vmem:[#allocation1] sm:$0xff pattern:$0x75316420]
        %v296 = vld.sshfl [vmem:[#allocation1 + $0x8] sm:$0xff pattern:$0x75316420]
        %v299 = vsel %vm238, %v295, 0.0
        %v300 = vsel %vm238, %v296, 0.0
        %v301 = vadd.f32 %v299, %v300
        %302 = vadd.xlane.f32.xlu0 %v301
        %v303 = vpop.xlane.xlu0 %302
        %v304 = vrot.slane %v303, 4
        %v305 = vadd.f32 %v303, %v304
        %v306 = vrot.slane %v305, 2
        %v307 = vadd.f32 %v305, %v306
        %v308 = vrot.slane %v307, 1
        %v309 = vadd.f32 %v307, %v308
        %s310 = vtos %v309
        %v311 = vmul.f32 %v231, %v230
        %313 = vst [vmem:[#allocation1] ss:$2 sm:$0xff] %v311
        %v314 = vld.sshfl [vmem:[#allocation1] sm:$0xff pattern:$0x75316420]
        %v315 = vld.sshfl [vmem:[#allocation1 + $0x8] sm:$0xff pattern:$0x75316420]
        %v318 = vsel %vm238, %v314, 0.0
        %v319 = vsel %vm238, %v315, 0.0
        %v320 = vadd.f32 %v318, %v319
        %321 = vadd.xlane.f32.xlu0 %v320
        %v322 = vpop.xlane.xlu0 %321
        %v323 = vrot.slane %v322, 4
        %v324 = vadd.f32 %v322, %v323
        %v325 = vrot.slane %v324, 2
        %v326 = vadd.f32 %v324, %v325
        %v327 = vrot.slane %v326, 1
        %v328 = vadd.f32 %v326, %v327
        %s329 = vtos %v328
        %331 = vst [vmem:[#allocation1] ss:$2 sm:$0xff] %v231
        %v332 = vld.sshfl [vmem:[#allocation1] sm:$0xff pattern:$0x75316420]
        %v333 = vld.sshfl [vmem:[#allocation1 + $0x8] sm:$0xff pattern:$0x75316420]
        %v336 = vsel %vm238, %v332, 0.0
        %v337 = vrot.slane %v336, 4
        %v338 = vadd.f32 %v336, %v337
        %v339 = vrot.slane %v338, 2
        %v340 = vadd.f32 %v338, %v339
        %v341 = vrot.slane %v340, 1
        %v342 = vadd.f32 %v340, %v341
        %v343 = vsel %vm238, %v333, 0.0
        %v344 = vrot.slane %v343, 4
        %v345 = vadd.f32 %v343, %v344
        %v346 = vrot.slane %v345, 2
        %v347 = vadd.f32 %v345, %v346
        %v348 = vrot.slane %v347, 1
        %v349 = vadd.f32 %v347, %v348
        %s350 = ssub.f32 %s310, %s329
        %v351 = vmul.f32 %v285, %v342
        %v352 = vmul.f32 %v286, %v349
        %vm353 = vcmask 1040384
        %v354 = vsel %vm353, %v351, 0.0
        %v355 = vsel %vm353, %v352, 0.0
        %v356 = vadd.f32 %v354, %v355
        %357 = vadd.xlane.f32.xlu0 %v356
        %v358 = vpop.xlane.xlu0 %357
        %v359 = vrot.slane %v358, 4
        %v360 = vadd.f32 %v358, %v359
        %v361 = vrot.slane %v360, 2
        %v362 = vadd.f32 %v360, %v361
        %v363 = vrot.slane %v362, 1
        %v364 = vadd.f32 %v362, %v363
        %s365 = vtos %v364
        %s366 = sadd.f32 %s350, %s365
        %v367 = vstv %s366
        %vm368 = vcmask 0
        %369 = vst.msk [vmem:[%s229] sm:$0x1] %vm368, %v367
        %p370 = scmp.lt.s32.totalorder %s23, 1
        %s371 = scalar_select %p370, %s23, 1
        %p372 = scmp.lt.s32.totalorder %s24, 0
        %s373 = scalar_select %p372, %s24, 0
        %s374 = sadd.s32 %s373, %s371
        %s375 = scalar_lea.vmem %s2, %s374
        // Predicated region
        $region37: #{tpu_custom_call.1} parent=27 // pred_check
          %p376 = pneg %p107
        $region38: #{tpu_custom_call.1} parent=27 // pred_check_branch
          %378 = sbr.rel (%p376) target = $region40
        $region39: #{tpu_custom_call.1} parent=27 // pred_region
          _
        $region40: #{tpu_custom_call.1} parent=27 // pred_fallthru
          _
      $region28: #{tpu_custom_call.1} parent=5 // pred_fallthru
        _
      %p379 = scmp.le.s32.totalorder 2, %s14
      // Predicated region
      $region41: #{tpu_custom_call.1} parent=5 // pred_check
        %p380 = pneg %p379
      $region42: #{tpu_custom_call.1} parent=5 // pred_check_branch
        %382 = sbr.rel (%p380) target = $region44
      $region43: #{tpu_custom_call.1} parent=5 // pred_region
        %s383 = ssub.s32 %s14, 2
        // Predicated region
        $region45: #{tpu_custom_call.1} parent=43 // pred_check
          %p384 = pneg %p113
        $region46: #{tpu_custom_call.1} parent=43 // pred_check_branch
          %386 = sbr.rel (%p384) target = $region48
        $region47: #{tpu_custom_call.1} parent=43 // pred_region
          %p387 = scmp.lt.s32.totalorder %s25, 1
          %s388 = scalar_select %p387, %s25, 1
          %p389 = scmp.lt.s32.totalorder %s26, 0
          %s390 = scalar_select %p389, %s26, 0
          %s391 = sadd.s32 %s390, %s388
          %s392 = scalar_lea.vmem %s2, %s391
        $region48: #{tpu_custom_call.1} parent=43 // pred_fallthru
          _
      $region44: #{tpu_custom_call.1} parent=5 // pred_fallthru
        _
    $region6: #{tpu_custom_call.1} parent=1 // loop_footer
      %s18 = sadd.s32 1, %s14
    $region7: #{tpu_custom_call.1} parent=1 // loop_footer_branch
      %13 = sbr.rel target = $region3
    $region8: #{tpu_custom_call.1} parent=1 // loop_exit
      _
    %393 = vsyncpa [#allocation3], 1
    %s394 = scalar_lea.sflag [#allocation3], 1
    %395 = vsyncpa %s394, 1
    %396 = vsyncpa [#allocation5], 1
    %s397 = scalar_lea.sflag [#allocation5], 1
    %398 = vsyncpa %s397, 1

</llo_original>
